<compile_context>
chip_gen: v7x
topology: tpu7x:2x2x1
jax: 0.10.0
libtpu: 0.0.40
codegen_flags: <defaults>
</compile_context>

<pallas_src>
import math
from functools import partial

import numpy as np
import jax
import jax.numpy as jnp
from jax import lax
from jax.experimental import pallas as pl
from jax.experimental.pallas import tpu as pltpu


_VMEM_LIMIT = 32 * 1024 * 1024  # >= default scoped VMEM on v5e/v6e/v7x, < physical


def _pick_tile(dim, target, align):
    """Largest tile <= target that divides dim and is a multiple of align.
    Falls back to the full dim (always satisfies the (8,128) layout rule).
    NOTE: for layout-unfriendly dims this can put the whole axis in one block."""
    if dim <= target:
        return dim
    t = (target // align) * align
    while t >= align:
        if dim % t == 0:
            return t
        t -= align
    return dim


# ---------------- Pallas kernels ----------------

def _qkv_proj_kernel(x_ref, wq_ref, wk_ref, wv_ref, q_ref, k_ref, v_ref,
                     acc_q, acc_k, acc_v):
    """Fused QKV projection: one x tile feeds three bf16 matmuls with f32 accumulators."""
    @pl.when(pl.program_id(2) == 0)
    def _init():
        acc_q[...] = jnp.zeros_like(acc_q)
        acc_k[...] = jnp.zeros_like(acc_k)
        acc_v[...] = jnp.zeros_like(acc_v)

    x = x_ref[...]
    acc_q[...] += jnp.dot(x, wq_ref[...], preferred_element_type=jnp.float32)
    acc_k[...] += jnp.dot(x, wk_ref[...], preferred_element_type=jnp.float32)
    acc_v[...] += jnp.dot(x, wv_ref[...], preferred_element_type=jnp.float32)

    @pl.when(pl.program_id(2) == pl.num_programs(2) - 1)
    def _done():
        q_ref[...] = acc_q[...].astype(q_ref.dtype)
        k_ref[...] = acc_k[...].astype(k_ref.dtype)
        v_ref[...] = acc_v[...].astype(v_ref.dtype)


def _linear_bias_kernel(x_ref, wt_ref, b_ref, o_ref, acc_ref):
    """Tiled y = x @ wt + b with f32 accumulation over the K grid axis."""
    @pl.when(pl.program_id(2) == 0)
    def _init():
        acc_ref[...] = jnp.zeros_like(acc_ref)

    acc_ref[...] += jnp.dot(x_ref[...], wt_ref[...],
                            preferred_element_type=jnp.float32)

    @pl.when(pl.program_id(2) == pl.num_programs(2) - 1)
    def _done():
        o_ref[...] = (acc_ref[...] + b_ref[...]).astype(o_ref.dtype)


def _lsa_attn_kernel(heads, dim_head, window, tq, tkv,
                     q_ref, k_ref, v_ref, o_ref, m_sc, l_sc, acc_sc):
    """Flash-style attention: grid=(B, N/tq, N/tkv); per-head running max/sum and a
    lane-dense (tq, heads*dim_head) f32 accumulator in VMEM scratch.  The softmax
    scale exp(temperature) is already folded into wq, so q arrives pre-scaled."""
    ki = pl.program_id(2)

    @pl.when(ki == 0)
    def _init():
        m_sc[...] = jnp.full_like(m_sc, -jnp.inf)
        l_sc[...] = jnp.zeros_like(l_sc)
        acc_sc[...] = jnp.zeros_like(acc_sc)

    # In-kernel causal local band mask.  torch masked_fill(mask, -max) semantics:
    # positions INSIDE the band get -max (exactly like the reference module).
    row = pl.program_id(1) * tq + lax.broadcasted_iota(jnp.int32, (tq, tkv), 0)
    col = ki * tkv + lax.broadcasted_iota(jnp.int32, (tq, tkv), 1)
    band = (col <= row) & (col >= row - (window - 1))
    neg = -jnp.finfo(jnp.float32).max

    for h in range(heads):                      # static unroll; score tiles are small now
        lo = h * dim_head
        hi = lo + dim_head
        qh = q_ref[:, lo:hi]                    # bf16 (tq, Dh)
        kh = k_ref[:, lo:hi]                    # bf16 (tkv, Dh)
        vh = v_ref[:, lo:hi]                    # bf16 (tkv, Dh)

        s = lax.dot_general(qh, kh, (((1,), (1,)), ((), ())),
                            preferred_element_type=jnp.float32)   # (tq, tkv) f32
        s = jnp.where(band, neg, s)

        m_prev = m_sc[h]                                          # (tq, 1)
        m_new = jnp.maximum(m_prev, jnp.max(s, axis=-1, keepdims=True))
        alpha = jnp.exp(m_prev - m_new)
        p = jnp.exp(s - m_new)
        l_sc[h] = alpha * l_sc[h] + jnp.sum(p, axis=-1, keepdims=True)
        # Cast attn DOWN to bf16 so the PV matmul stays on the bf16 MXU path.
        acc_sc[:, lo:hi] = (alpha * acc_sc[:, lo:hi]
                            + jnp.dot(p.astype(jnp.bfloat16), vh,
                                      preferred_element_type=jnp.float32))
        m_sc[h] = m_new

    @pl.when(ki == pl.num_programs(2) - 1)
    def _finalize():
        for h in range(heads):
            lo = h * dim_head
            hi = lo + dim_head
            inv = pl.reciprocal(l_sc[h], approx=True)             # EUP slot, ~free
            o_ref[:, lo:hi] = (acc_sc[:, lo:hi] * inv).astype(o_ref.dtype)
    # TODO(synk): for very large `heads` move the head loop onto the grid (or into a
    # lax.fori_loop) to bound live ranges / shrink per-step K/V tiles further.


# ---------------- Pallas wrappers ----------------

def pallas_qkv_proj(x2d, wq_t, wk_t, wv_t):
    """q, k, v = x2d @ w{q,k,v}_t  (each (M, inner), bf16)."""
    M, K = x2d.shape
    O = wq_t.shape[1]
    tm = _pick_tile(M, 512, 16)      # 16-aligned for bf16 sublane packing
    tn = _pick_tile(O, 512, 128)
    tk = _pick_tile(K, 512, 128)
    x_spec = pl.BlockSpec((tm, tk), lambda i, j, k: (i, k))
    w_spec = pl.BlockSpec((tk, tn), lambda i, j, k: (k, j))
    o_spec = pl.BlockSpec((tm, tn), lambda i, j, k: (i, j))
    out_sds = jax.ShapeDtypeStruct((M, O), jnp.bfloat16)
    return pl.pallas_call(
        _qkv_proj_kernel,
        out_shape=(out_sds, out_sds, out_sds),
        grid=(M // tm, O // tn, K // tk),
        in_specs=[x_spec, w_spec, w_spec, w_spec],
        out_specs=(o_spec, o_spec, o_spec),
        scratch_shapes=[pltpu.VMEM((tm, tn), jnp.float32)] * 3,
        compiler_params=pltpu.CompilerParams(
            dimension_semantics=("parallel", "parallel", "arbitrary"),
            vmem_limit_bytes=_VMEM_LIMIT),
    )(x2d, wq_t, wk_t, wv_t)


def pallas_linear_bias(x2d, wt, bias2d, out_dtype=jnp.float32):
    """y = x2d @ wt + bias (tiled, bf16 MXU inputs, f32 accumulation)."""
    M, K = x2d.shape
    O = wt.shape[1]
    tm = _pick_tile(M, 512, 16)
    tn = _pick_tile(O, 512, 128)
    tk = _pick_tile(K, 512, 128)
    return pl.pallas_call(
        _linear_bias_kernel,
        out_shape=jax.ShapeDtypeStruct((M, O), out_dtype),
        grid=(M // tm, O // tn, K // tk),
        in_specs=[pl.BlockSpec((tm, tk), lambda i, j, k: (i, k)),
                  pl.BlockSpec((tk, tn), lambda i, j, k: (k, j)),
                  pl.BlockSpec((1, tn), lambda i, j, k: (0, j))],
        out_specs=pl.BlockSpec((tm, tn), lambda i, j, k: (i, j)),
        scratch_shapes=[pltpu.VMEM((tm, tn), jnp.float32)],
        compiler_params=pltpu.CompilerParams(
            dimension_semantics=("parallel", "parallel", "arbitrary"),
            vmem_limit_bytes=_VMEM_LIMIT),
    )(x2d, wt, bias2d)


def pallas_lsa_attention(q, k, v, heads, dim_head, window):
    """q, k, v: (B, N, H*Dh) bf16 (scale pre-folded into q) -> out (B, N, H*Dh) bf16."""
    B, N, inner = q.shape
    tq = _pick_tile(N, 256, 16)      # query tile (sublane dim of scores)
    tkv = _pick_tile(N, 256, 128)    # key tile (lane dim of scores)
    kernel = partial(_lsa_attn_kernel, heads, dim_head, window, tq, tkv)
    return pl.pallas_call(
        kernel,
        out_shape=jax.ShapeDtypeStruct((B, N, inner), jnp.bfloat16),
        grid=(B, N // tq, N // tkv),
        in_specs=[pl.BlockSpec((None, tq, inner), lambda b, qi, ki: (b, qi, 0)),
                  pl.BlockSpec((None, tkv, inner), lambda b, qi, ki: (b, ki, 0)),
                  pl.BlockSpec((None, tkv, inner), lambda b, qi, ki: (b, ki, 0))],
        out_specs=pl.BlockSpec((None, tq, inner), lambda b, qi, ki: (b, qi, 0)),
        scratch_shapes=[pltpu.VMEM((heads, tq, 1), jnp.float32),   # running max
                        pltpu.VMEM((heads, tq, 1), jnp.float32),   # running sum
                        pltpu.VMEM((tq, inner), jnp.float32)],     # lane-dense acc
        compiler_params=pltpu.CompilerParams(
            dimension_semantics=("parallel", "parallel", "arbitrary"),
            vmem_limit_bytes=_VMEM_LIMIT),
    )(q, k, v)


# ---------------- parameter setup (one-time, plain-JAX glue) ----------------

def sn_effective_weight(w):
    """SNLinear.get_weight() at init time, eval mode:
    (w / sigma_power_iter) * sigma_param, where sigma_param was initialized to the
    top singular value from SVD and u is the top right singular vector."""
    _, s, vh = jnp.linalg.svd(w, full_matrices=False)
    u0 = vh[0]
    sigma_param = s[0]
    v = w @ u0
    v = v / jnp.maximum(jnp.linalg.norm(v), 1e-12)
    u1 = w.T @ v
    u1 = u1 / jnp.maximum(jnp.linalg.norm(u1), 1e-12)
    sigma_pi = jnp.einsum('c,cd,d->', v, w, u1)
    return (w / sigma_pi) * sigma_param


def init_lsa_params(key, dim, heads, dim_head):
    inner = heads * dim_head
    k1, k2, k3 = jax.random.split(key, 3)
    std = 0.02  # SNLinear init_std with init_multiplier=1.0
    w_qkv = std * jax.random.truncated_normal(k1, -2.0, 2.0, (inner * 3, dim), jnp.float32)
    w_out = std * jax.random.truncated_normal(k2, -2.0, 2.0, (dim, inner), jnp.float32)
    bound = 1.0 / math.sqrt(inner)
    b_out = jax.random.uniform(k3, (dim,), jnp.float32, -bound, bound)
    temperature = jnp.log(jnp.asarray(dim_head ** -0.5, jnp.float32))
    return dict(w_qkv=w_qkv, w_out=w_out, b_out=b_out, temperature=temperature)


def prepare_lsa_params(params, heads, dim_head):
    """One-time prep: SVD/power-iteration reparam, weight split+transpose, fold
    exp(temperature) into wq in f32, bf16 cast."""
    inner = heads * dim_head
    w_qkv = sn_effective_weight(params['w_qkv'])     # (3*inner, dim)
    w_out = sn_effective_weight(params['w_out'])     # (dim, inner)
    wq, wk, wv = (w_qkv[:inner], w_qkv[inner:2 * inner], w_qkv[2 * inner:])
    scale = jnp.exp(params['temperature'])           # softmax temperature, folded into wq
    return dict(
        wq_t=(wq.T * scale).astype(jnp.bfloat16),    # (dim, inner), pre-scaled in f32
        wk_t=wk.T.astype(jnp.bfloat16),
        wv_t=wv.T.astype(jnp.bfloat16),
        wout_t=w_out.T.astype(jnp.bfloat16),         # (inner, dim)
        b_out=params['b_out'].astype(jnp.float32).reshape(1, -1),
    )


# ---------------- LSA forward ----------------

def lsa_forward(prep, x, heads, dim_head, local_window_size=8):
    B, N, D = x.shape
    inner = heads * dim_head
    xb = x.astype(jnp.bfloat16).reshape(B * N, D)

    # to_qkv (bias=False): one fused tiled matmul producing q, k, v already in
    # (B, N, H*Dh) layout -> no HBM transposes.
    q, k, v = pallas_qkv_proj(xb, prep['wq_t'], prep['wk_t'], prep['wv_t'])
    q = q.reshape(B, N, inner)
    k = k.reshape(B, N, inner)
    v = v.reshape(B, N, inner)

    out = pallas_lsa_attention(q, k, v, heads, dim_head, local_window_size)  # (B,N,inner)

    # to_out = SNLinear(inner, dim) + Dropout(p=0.0) (identity in eval)
    y = pallas_linear_bias(out.reshape(B * N, inner), prep['wout_t'], prep['b_out'])
    return y.reshape(B, N, D)
    # TODO(synk): prev_token_scores / create_topk_attention_mask, the 'sqrtd'/'inf'
    # scaling options and generate_token_scores (token_scores) branches are not
    # implemented (default baseline eval path only).


# ---------------- pure-JAX f32 reference for verification ----------------

def lsa_reference(params, x, heads, dim_head, local_window_size=8):
    B, N, D = x.shape
    inner = heads * dim_head
    w_qkv = sn_effective_weight(params['w_qkv'])
    w_out = sn_effective_weight(params['w_out'])
    qkv = (x @ w_qkv.T).reshape(B, N, 3, heads, dim_head)
    q, k, v = (jnp.transpose(qkv[:, :, i], (0, 2, 1, 3)) for i in range(3))
    dots = jnp.einsum('bhnd,bhmd->bhnm', q, k) * jnp.exp(params['temperature'])
    row = jnp.arange(N)[:, None]
    col = jnp.arange(N)[None, :]
    band = (col <= row) & (col >= row - (local_window_size - 1))
    dots = jnp.where(band, -jnp.finfo(dots.dtype).max, dots)
    attn = jax.nn.softmax(dots, axis=-1)
    out = jnp.einsum('bhnm,bhmd->bhnd', attn, v)
    out = jnp.transpose(out, (0, 2, 1, 3)).reshape(B, N, inner)
    return out @ w_out.T + params['b_out']


if __name__ == "__main__":
    B, N, dim = 2, 16, 32
    heads, dim_head, window = 4, 16, 8

    key = jax.random.PRNGKey(0)
    kx, kp = jax.random.split(key)
    x = jax.random.normal(kx, (B, N, dim), jnp.float32)
    params = init_lsa_params(kp, dim, heads, dim_head)
    prep = prepare_lsa_params(params, heads, dim_head)

    y = lsa_forward(prep, x, heads, dim_head, window)
    y = jax.block_until_ready(y)

    y_ref = lsa_reference(params, x, heads, dim_head, window)
    np.testing.assert_allclose(np.asarray(y, dtype=np.float32), np.asarray(y_ref),
                               rtol=2e-2, atol=2e-2)
    print("KERNEL_OK")
</pallas_src>

<mosaic_0001>
module attributes {stable_mosaic.version = 11 : i64} {
  func.func @_qkv_proj_kernel(%arg0: i32, %arg1: i32, %arg2: i32, %arg3: memref<32x32xbf16, #tpu.memory_space<vmem>>, %arg4: memref<32x64xbf16, #tpu.memory_space<vmem>>, %arg5: memref<32x64xbf16, #tpu.memory_space<vmem>>, %arg6: memref<32x64xbf16, #tpu.memory_space<vmem>>, %arg7: memref<32x64xbf16, #tpu.memory_space<vmem>>, %arg8: memref<32x64xbf16, #tpu.memory_space<vmem>>, %arg9: memref<32x64xbf16, #tpu.memory_space<vmem>>, %arg10: memref<32x64xf32, #tpu.memory_space<vmem>>, %arg11: memref<32x64xf32, #tpu.memory_space<vmem>>, %arg12: memref<32x64xf32, #tpu.memory_space<vmem>>) attributes {dimension_semantics = [#tpu.dimension_semantics<parallel>, #tpu.dimension_semantics<parallel>, #tpu.dimension_semantics<arbitrary>], iteration_bounds = array<i64: 1, 1, 1>, scalar_prefetch = 0 : i64, scratch_operands = 3 : i64, tpu.core_type = #tpu.core_type<tc>, window_params = [{transform_indices = @transform_0, window_bounds = array<i64: 32, 32>}, {transform_indices = @transform_1, window_bounds = array<i64: 32, 64>}, {transform_indices = @transform_2, window_bounds = array<i64: 32, 64>}, {transform_indices = @transform_3, window_bounds = array<i64: 32, 64>}, {transform_indices = @transform_4, window_bounds = array<i64: 32, 64>}, {transform_indices = @transform_5, window_bounds = array<i64: 32, 64>}, {transform_indices = @transform_6, window_bounds = array<i64: 32, 64>}]} {
    %c0_i32 = arith.constant 0 : i32
    %0 = arith.cmpi eq, %arg2, %c0_i32 : i32
    %1 = arith.extui %0 : i1 to i32
    %c0_i32_0 = arith.constant 0 : i32
    %2 = arith.cmpi ne, %1, %c0_i32_0 : i32
    scf.if %2 {
      %cst_24 = arith.constant 0.000000e+00 : f32
      %22 = vector.broadcast %cst_24 : f32 to vector<32x64xf32>
      %c0_25 = arith.constant 0 : index
      %c0_26 = arith.constant 0 : index
      %23 = vector.load %arg10[%c0_25, %c0_26] : memref<32x64xf32, #tpu.memory_space<vmem>>, vector<32x64xf32>
      tpu.vector_store %arg10[%c0_25, %c0_26], %22 {strides = array<i32>} : memref<32x64xf32, #tpu.memory_space<vmem>>, vector<32x64xf32>,
      %cst_27 = arith.constant 0.000000e+00 : f32
      %24 = vector.broadcast %cst_27 : f32 to vector<32x64xf32>
      %c0_28 = arith.constant 0 : index
      %c0_29 = arith.constant 0 : index
      %25 = vector.load %arg11[%c0_28, %c0_29] : memref<32x64xf32, #tpu.memory_space<vmem>>, vector<32x64xf32>
      tpu.vector_store %arg11[%c0_28, %c0_29], %24 {strides = array<i32>} : memref<32x64xf32, #tpu.memory_space<vmem>>, vector<32x64xf32>,
      %cst_30 = arith.constant 0.000000e+00 : f32
      %26 = vector.broadcast %cst_30 : f32 to vector<32x64xf32>
      %c0_31 = arith.constant 0 : index
      %c0_32 = arith.constant 0 : index
      %27 = vector.load %arg12[%c0_31, %c0_32] : memref<32x64xf32, #tpu.memory_space<vmem>>, vector<32x64xf32>
      tpu.vector_store %arg12[%c0_31, %c0_32], %26 {strides = array<i32>} : memref<32x64xf32, #tpu.memory_space<vmem>>, vector<32x64xf32>,
    } else {
    }
    %c0 = arith.constant 0 : index
    %c0_1 = arith.constant 0 : index
    %3 = vector.load %arg3[%c0, %c0_1] : memref<32x32xbf16, #tpu.memory_space<vmem>>, vector<32x32xbf16>
    %c0_2 = arith.constant 0 : index
    %c0_3 = arith.constant 0 : index
    %4 = vector.load %arg10[%c0_2, %c0_3] : memref<32x64xf32, #tpu.memory_space<vmem>>, vector<32x64xf32>
    %c0_4 = arith.constant 0 : index
    %c0_5 = arith.constant 0 : index
    %5 = vector.load %arg4[%c0_4, %c0_5] : memref<32x64xbf16, #tpu.memory_space<vmem>>, vector<32x64xbf16>
    %cst = arith.constant dense<0.000000e+00> : vector<32x64xf32>
    %6 = tpu.matmul %3, %5, %cst {dimension_numbers = #tpu.dot_dimension_numbers<[1], [0], [0], [1], [0, 0, 1, 1], [], []>} : vector<32x32xbf16>, vector<32x64xbf16>, vector<32x64xf32> -> vector<32x64xf32>
    %7 = arith.addf %4, %6 : vector<32x64xf32>
    %c0_6 = arith.constant 0 : index
    %c0_7 = arith.constant 0 : index
    %8 = vector.load %arg10[%c0_6, %c0_7] : memref<32x64xf32, #tpu.memory_space<vmem>>, vector<32x64xf32>
    tpu.vector_store %arg10[%c0_6, %c0_7], %7 {strides = array<i32>} : memref<32x64xf32, #tpu.memory_space<vmem>>, vector<32x64xf32>,
    %c0_8 = arith.constant 0 : index
    %c0_9 = arith.constant 0 : index
    %9 = vector.load %arg11[%c0_8, %c0_9] : memref<32x64xf32, #tpu.memory_space<vmem>>, vector<32x64xf32>
    %c0_10 = arith.constant 0 : index
    %c0_11 = arith.constant 0 : index
    %10 = vector.load %arg5[%c0_10, %c0_11] : memref<32x64xbf16, #tpu.memory_space<vmem>>, vector<32x64xbf16>
    %cst_12 = arith.constant dense<0.000000e+00> : vector<32x64xf32>
    %11 = tpu.matmul %3, %10, %cst_12 {dimension_numbers = #tpu.dot_dimension_numbers<[1], [0], [0], [1], [0, 0, 1, 1], [], []>} : vector<32x32xbf16>, vector<32x64xbf16>, vector<32x64xf32> -> vector<32x64xf32>
    %12 = arith.addf %9, %11 : vector<32x64xf32>
    %c0_13 = arith.constant 0 : index
    %c0_14 = arith.constant 0 : index
    %13 = vector.load %arg11[%c0_13, %c0_14] : memref<32x64xf32, #tpu.memory_space<vmem>>, vector<32x64xf32>
    tpu.vector_store %arg11[%c0_13, %c0_14], %12 {strides = array<i32>} : memref<32x64xf32, #tpu.memory_space<vmem>>, vector<32x64xf32>,
    %c0_15 = arith.constant 0 : index
    %c0_16 = arith.constant 0 : index
    %14 = vector.load %arg12[%c0_15, %c0_16] : memref<32x64xf32, #tpu.memory_space<vmem>>, vector<32x64xf32>
    %c0_17 = arith.constant 0 : index
    %c0_18 = arith.constant 0 : index
    %15 = vector.load %arg6[%c0_17, %c0_18] : memref<32x64xbf16, #tpu.memory_space<vmem>>, vector<32x64xbf16>
    %cst_19 = arith.constant dense<0.000000e+00> : vector<32x64xf32>
    %16 = tpu.matmul %3, %15, %cst_19 {dimension_numbers = #tpu.dot_dimension_numbers<[1], [0], [0], [1], [0, 0, 1, 1], [], []>} : vector<32x32xbf16>, vector<32x64xbf16>, vector<32x64xf32> -> vector<32x64xf32>
    %17 = arith.addf %14, %16 : vector<32x64xf32>
    %c0_20 = arith.constant 0 : index
    %c0_21 = arith.constant 0 : index
    %18 = vector.load %arg12[%c0_20, %c0_21] : memref<32x64xf32, #tpu.memory_space<vmem>>, vector<32x64xf32>
    tpu.vector_store %arg12[%c0_20, %c0_21], %17 {strides = array<i32>} : memref<32x64xf32, #tpu.memory_space<vmem>>, vector<32x64xf32>,
    %c0_i32_22 = arith.constant 0 : i32
    %19 = arith.cmpi eq, %arg2, %c0_i32_22 : i32
    %20 = arith.extui %19 : i1 to i32
    %c0_i32_23 = arith.constant 0 : i32
    %21 = arith.cmpi ne, %20, %c0_i32_23 : i32
    scf.if %21 {
      %c0_24 = arith.constant 0 : index
      %c0_25 = arith.constant 0 : index
      %22 = vector.load %arg10[%c0_24, %c0_25] : memref<32x64xf32, #tpu.memory_space<vmem>>, vector<32x64xf32>
      %23 = arith.truncf %22 : vector<32x64xf32> to vector<32x64xbf16>
      %c0_26 = arith.constant 0 : index
      %c0_27 = arith.constant 0 : index
      %24 = vector.load %arg7[%c0_26, %c0_27] : memref<32x64xbf16, #tpu.memory_space<vmem>>, vector<32x64xbf16>
      tpu.vector_store %arg7[%c0_26, %c0_27], %23 {strides = array<i32>} : memref<32x64xbf16, #tpu.memory_space<vmem>>, vector<32x64xbf16>,
      %c0_28 = arith.constant 0 : index
      %c0_29 = arith.constant 0 : index
      %25 = vector.load %arg11[%c0_28, %c0_29] : memref<32x64xf32, #tpu.memory_space<vmem>>, vector<32x64xf32>
      %26 = arith.truncf %25 : vector<32x64xf32> to vector<32x64xbf16>
      %c0_30 = arith.constant 0 : index
      %c0_31 = arith.constant 0 : index
      %27 = vector.load %arg8[%c0_30, %c0_31] : memref<32x64xbf16, #tpu.memory_space<vmem>>, vector<32x64xbf16>
      tpu.vector_store %arg8[%c0_30, %c0_31], %26 {strides = array<i32>} : memref<32x64xbf16, #tpu.memory_space<vmem>>, vector<32x64xbf16>,
      %c0_32 = arith.constant 0 : index
      %c0_33 = arith.constant 0 : index
      %28 = vector.load %arg12[%c0_32, %c0_33] : memref<32x64xf32, #tpu.memory_space<vmem>>, vector<32x64xf32>
      %29 = arith.truncf %28 : vector<32x64xf32> to vector<32x64xbf16>
      %c0_34 = arith.constant 0 : index
      %c0_35 = arith.constant 0 : index
      %30 = vector.load %arg9[%c0_34, %c0_35] : memref<32x64xbf16, #tpu.memory_space<vmem>>, vector<32x64xbf16>
      tpu.vector_store %arg9[%c0_34, %c0_35], %29 {strides = array<i32>} : memref<32x64xbf16, #tpu.memory_space<vmem>>, vector<32x64xbf16>,
    } else {
    }
    return
  }
  func.func @transform_0(%arg0: i32, %arg1: i32, %arg2: i32) -> (i32, i32) {
    %c0_i32 = arith.constant 0 : i32
    return %arg0, %arg2 : i32, i32
  }
  func.func @transform_1(%arg0: i32, %arg1: i32, %arg2: i32) -> (i32, i32) {
    %c0_i32 = arith.constant 0 : i32
    return %arg2, %arg1 : i32, i32
  }
  func.func @transform_2(%arg0: i32, %arg1: i32, %arg2: i32) -> (i32, i32) {
    %c0_i32 = arith.constant 0 : i32
    return %arg2, %arg1 : i32, i32
  }
  func.func @transform_3(%arg0: i32, %arg1: i32, %arg2: i32) -> (i32, i32) {
    %c0_i32 = arith.constant 0 : i32
    return %arg2, %arg1 : i32, i32
  }
  func.func @transform_4(%arg0: i32, %arg1: i32, %arg2: i32) -> (i32, i32) {
    %c0_i32 = arith.constant 0 : i32
    return %arg0, %arg1 : i32, i32
  }
  func.func @transform_5(%arg0: i32, %arg1: i32, %arg2: i32) -> (i32, i32) {
    %c0_i32 = arith.constant 0 : i32
    return %arg0, %arg1 : i32, i32
  }
  func.func @transform_6(%arg0: i32, %arg1: i32, %arg2: i32) -> (i32, i32) {
    %c0_i32 = arith.constant 0 : i32
    return %arg0, %arg1 : i32, i32
  }
}

</mosaic_0001>

<llo_original>
// kernel: tpu_custom_call.1
$region0: #{tpu_custom_call.1}
  #allocation0 [shape = 'u32[]', space=smem, size = 0x4, offset = 0x4, fixed_abs, tag = 'smem constant byte address 0x4 - core index']
  #allocation1 [shape = 'u32[144,128]{1,0:T(1,128)}', space=vmem, size = 0x12000, scoped, tag = 'internal scratch']
  #allocation2 [shape = 'f32[32,64]{1,0:T(8,128)}', space=vmem, size = 0x4000, scoped, tag = 'scratch operand']
  #allocation3 [shape = 'f32[32,64]{1,0:T(8,128)}', space=vmem, size = 0x4000, scoped, tag = 'scratch operand']
  #allocation4 [shape = 'f32[32,64]{1,0:T(8,128)}', space=vmem, size = 0x4000, scoped, tag = 'scratch operand']
  %s0 = inlined_call_operand.hbm [shape: bf16[32,32], index: 0, kind: input, shape index: {}]
  %s1 = inlined_call_operand.hbm [shape: bf16[32,64], index: 1, kind: input, shape index: {}]
  %s2 = inlined_call_operand.hbm [shape: bf16[32,64], index: 2, kind: input, shape index: {}]
  %s3 = inlined_call_operand.hbm [shape: bf16[32,64], index: 3, kind: input, shape index: {}]
  %s4 = inlined_call_operand.hbm [shape: bf16[32,64], index: 4, kind: output, shape index: {0}]
  %s5 = inlined_call_operand.hbm [shape: bf16[32,64], index: 5, kind: output, shape index: {1}]
  %s6 = inlined_call_operand.hbm [shape: bf16[32,64], index: 6, kind: output, shape index: {2}]
  %7 = xla_tuple %s4, %s5, %s6
  %s8 = sld [smem:[#allocation0]]
  $region66: #{tpu_custom_call.1} parent=0
    _
  %s10 = ssub.s32 1, %s8
  %s11 = scalar_select 0, %s10, %s8
  $region1: #{tpu_custom_call.1} parent=0
    #allocation5 [shape = 'u8[8192]{0}', space=vmem, size = 0x2000, scoped, tag = 'input window, operand 0, single buffered']
    #allocation6 [shape = 's32[1]{0}', space=sflag, size = 0x4, scoped, tag = 'scoped memory for tpu_custom_call.1']
    #allocation7 [shape = 's32[1]{0}', space=sflag, size = 0x4, scoped, tag = 'scoped memory for tpu_custom_call.1']
    #allocation8 [shape = 'u8[8192]{0}', space=vmem, size = 0x2000, scoped, tag = 'input window, operand 1, single buffered']
    #allocation9 [shape = 's32[1]{0}', space=sflag, size = 0x4, scoped, tag = 'scoped memory for tpu_custom_call.1']
    #allocation10 [shape = 'u8[8192]{0}', space=vmem, size = 0x2000, scoped, tag = 'input window, operand 2, single buffered']
    #allocation11 [shape = 'u8[8192]{0}', space=vmem, size = 0x2000, scoped, tag = 'input window, operand 3, single buffered']
    #allocation12 [shape = 's32[1]{0}', space=sflag, size = 0x4, scoped, tag = 'scoped memory for tpu_custom_call.1']
    #allocation13 [shape = 'u8[8192]{0}', space=vmem, size = 0x2000, scoped, tag = 'output window, operand 0, single buffered']
    #allocation14 [shape = 'u8[8192]{0}', space=vmem, size = 0x2000, scoped, tag = 'output window, operand 1, single buffered']
    #allocation15 [shape = 's32[1]{0}', space=sflag, size = 0x4, scoped, tag = 'scoped memory for tpu_custom_call.1']
    #allocation16 [shape = 'u8[8192]{0}', space=vmem, size = 0x2000, scoped, tag = 'output window, operand 2, single buffered']
    %12 = vsyncpa [#allocation6], 0
    %13 = vsyncpa [#allocation9], 0
    %14 = vsyncpa [#allocation12], 0
    %15 = vsyncpa [#allocation7], 0
    %16 = vsyncpa [#allocation15], 0
    // Predicated region
    $region2: #{tpu_custom_call.1} parent=1 // pred_check
      _
    $region3: #{tpu_custom_call.1} parent=1 // pred_check_branch
      %18 = sbr.rel (0) target = $region5
    $region4: #{tpu_custom_call.1} parent=1 // pred_region
      %s20 = ssub.s32 256, 256
      %21 = vsyncadd [#allocation6], %s20
      %s22 = sshll.u32 [#allocation5], 4
      %s23 = int_to_ptr.vmem [resolvable:$true] %s22
      %28 = dma.hbm_to_vmem [thread:$0]  %s0, 256, %s23, [#allocation6], 64, 64, 4
    $region5: #{tpu_custom_call.1} parent=1 // pred_fallthru
      _
    // Predicated region
    $region6: #{tpu_custom_call.1} parent=1 // pred_check
      _
    $region7: #{tpu_custom_call.1} parent=1 // pred_check_branch
      %30 = sbr.rel (0) target = $region9
    $region8: #{tpu_custom_call.1} parent=1 // pred_region
      %s32 = ssub.s32 256, 256
      %33 = vsyncadd [#allocation9], %s32
      %s34 = sshll.u32 [#allocation8], 4
      %s35 = int_to_ptr.vmem [resolvable:$true] %s34
      %40 = dma.hbm_to_vmem [thread:$0]  %s1, 256, %s35, [#allocation9], 64, 64, 4
    $region9: #{tpu_custom_call.1} parent=1 // pred_fallthru
      _
    // Predicated region
    $region10: #{tpu_custom_call.1} parent=1 // pred_check
      _
    $region11: #{tpu_custom_call.1} parent=1 // pred_check_branch
      %42 = sbr.rel (0) target = $region13
    $region12: #{tpu_custom_call.1} parent=1 // pred_region
      %s44 = ssub.s32 256, 256
      %45 = vsyncadd [#allocation9], %s44
      %s46 = sshll.u32 [#allocation10], 4
      %s47 = int_to_ptr.vmem [resolvable:$true] %s46
      %52 = dma.hbm_to_vmem [thread:$0]  %s2, 256, %s47, [#allocation9], 64, 64, 4
    $region13: #{tpu_custom_call.1} parent=1 // pred_fallthru
      _
    // Predicated region
    $region14: #{tpu_custom_call.1} parent=1 // pred_check
      _
    $region15: #{tpu_custom_call.1} parent=1 // pred_check_branch
      %54 = sbr.rel (0) target = $region17
    $region16: #{tpu_custom_call.1} parent=1 // pred_region
      %s56 = ssub.s32 256, 256
      %57 = vsyncadd [#allocation12], %s56
      %s58 = sshll.u32 [#allocation11], 4
      %s59 = int_to_ptr.vmem [resolvable:$true] %s58
      %64 = dma.hbm_to_vmem [thread:$0]  %s3, 256, %s59, [#allocation12], 64, 64, 4
    $region17: #{tpu_custom_call.1} parent=1 // pred_fallthru
      _
    // Predicated region
    $region18: #{tpu_custom_call.1} parent=1 // pred_check
      _
    $region19: #{tpu_custom_call.1} parent=1 // pred_check_branch
      %66 = sbr.rel (0) target = $region21
    $region20: #{tpu_custom_call.1} parent=1 // pred_region
      %67 = dma.done [#allocation6], 256
    $region21: #{tpu_custom_call.1} parent=1 // pred_fallthru
      _
    // Predicated region
    $region22: #{tpu_custom_call.1} parent=1 // pred_check
      _
    $region23: #{tpu_custom_call.1} parent=1 // pred_check_branch
      %69 = sbr.rel (0) target = $region25
    $region24: #{tpu_custom_call.1} parent=1 // pred_region
      %70 = dma.done [#allocation9], 256
    $region25: #{tpu_custom_call.1} parent=1 // pred_fallthru
      _
    // Predicated region
    $region26: #{tpu_custom_call.1} parent=1 // pred_check
      _
    $region27: #{tpu_custom_call.1} parent=1 // pred_check_branch
      %72 = sbr.rel (0) target = $region29
    $region28: #{tpu_custom_call.1} parent=1 // pred_region
      %73 = dma.done [#allocation9], 256
    $region29: #{tpu_custom_call.1} parent=1 // pred_fallthru
      _
    // Predicated region
    $region30: #{tpu_custom_call.1} parent=1 // pred_check
      _
    $region31: #{tpu_custom_call.1} parent=1 // pred_check_branch
      %75 = sbr.rel (0) target = $region33
    $region32: #{tpu_custom_call.1} parent=1 // pred_region
      %76 = dma.done [#allocation12], 256
    $region33: #{tpu_custom_call.1} parent=1 // pred_fallthru
      _
    %p78 = scmp.eq.s32.totalorder 0, 0
    // Predicated region
    $region34: #{tpu_custom_call.1} parent=1 // pred_check
      %p79 = pneg %p78
    $region35: #{tpu_custom_call.1} parent=1 // pred_check_branch
      %81 = sbr.rel (%p79) target = $region37
    $region36: #{tpu_custom_call.1} parent=1 // pred_region
      %vm82 = vcmask 523264
      %83 = vst.msk [vmem:[#allocation2] sm:$0xff] %vm82, 0.0
      %84 = vst.msk [vmem:[#allocation2 + $0x8] sm:$0xff] %vm82, 0.0
      %85 = vst.msk [vmem:[#allocation2 + $0x10] sm:$0xff] %vm82, 0.0
      %86 = vst.msk [vmem:[#allocation2 + $0x18] sm:$0xff] %vm82, 0.0
      %87 = vst.msk [vmem:[#allocation3] sm:$0xff] %vm82, 0.0
      %88 = vst.msk [vmem:[#allocation3 + $0x8] sm:$0xff] %vm82, 0.0
      %89 = vst.msk [vmem:[#allocation3 + $0x10] sm:$0xff] %vm82, 0.0
      %90 = vst.msk [vmem:[#allocation3 + $0x18] sm:$0xff] %vm82, 0.0
      %91 = vst.msk [vmem:[#allocation4] sm:$0xff] %vm82, 0.0
      %92 = vst.msk [vmem:[#allocation4 + $0x8] sm:$0xff] %vm82, 0.0
      %93 = vst.msk [vmem:[#allocation4 + $0x10] sm:$0xff] %vm82, 0.0
      %94 = vst.msk [vmem:[#allocation4 + $0x18] sm:$0xff] %vm82, 0.0
    $region37: #{tpu_custom_call.1} parent=1 // pred_fallthru
      _
    %v95 = vld [vmem:[#allocation5] sm:$0xf]
    %v96 = vld [vmem:[#allocation5 + $0x4] sm:$0xf]
    %v97 = vld [vmem:[#allocation5 + $0x8] sm:$0xf]
    %v98 = vld [vmem:[#allocation5 + $0xc] sm:$0xf]
    %v99 = vld [vmem:[#allocation2] sm:$0xff]
    %v100 = vld [vmem:[#allocation2 + $0x8] sm:$0xff]
    %v101 = vld [vmem:[#allocation2 + $0x10] sm:$0xff]
    %v102 = vld [vmem:[#allocation2 + $0x18] sm:$0xff]
    %v103 = vld [vmem:[#allocation8] sm:$0xf]
    %v104 = vld [vmem:[#allocation8 + $0x4] sm:$0xf]
    %v105 = vld [vmem:[#allocation8 + $0x8] sm:$0xf]
    %v106 = vld [vmem:[#allocation8 + $0xc] sm:$0xf]
    %v111 = vunpack.c.l.b16 %v95
    %v112 = vunpack.c.l.b16 %v96
    %v113 = vunpack.c.l.b16 %v97
    %v114 = vunpack.c.l.b16 %v98
    %v115 = vpack.c.b16 %v112, %v111
    %v116 = vpack.c.b16 %v114, %v113
    %v121 = vunpack.c.l.b16 %v103
    %v122 = vunpack.c.l.b16 %v104
    %v123 = vunpack.c.l.b16 %v105
    %v124 = vunpack.c.l.b16 %v106
    %v125 = vpack.c.b16 %v122, %v121
    %v126 = vpack.c.b16 %v124, %v123
    %vm129 = vcmask 261120
    %v131 = vsel %vm129, %v115, 0
    %v134 = vsel %vm129, %v116, 0
    %136 = vmatprep.subr.bf16.mxu0 0
    %137 = vmatpush1.bf16.msra.mxu0 %v125
    %138 = vmatprep.subr.bf16.mxu0 0
    %139 = vmatpush1.bf16.msra.mxu0 %v126
    %140 = vmatprep.subr.bf16.mxu0 0
    %141 = vmatpush1.bf16.msra.mxu0 0
    %142 = vmatprep.subr.bf16.mxu0 0
    %143 = vmatpush1.bf16.msra.mxu0 0
    %144 = vmatprep.subr.bf16.mxu0 0
    %145 = vmatpush1.bf16.msra.mxu0 0
    %146 = vmatprep.subr.bf16.mxu0 0
    %147 = vmatpush1.bf16.msra.mxu0 0
    %148 = vmatprep.subr.bf16.mxu0 0
    %149 = vmatpush1.bf16.msra.mxu0 0
    %150 = vmatprep.subr.bf16.mxu0 0
    %151 = vmatpush1.bf16.msra.mxu0 0
    %152 = vmatprep.subr.bf16.mxu0 0
    %153 = vmatpush1.bf16.msra.mxu0 0
    %154 = vmatprep.subr.bf16.mxu0 0
    %155 = vmatpush1.bf16.msra.mxu0 0
    %156 = vmatprep.subr.bf16.mxu0 0
    %157 = vmatpush1.bf16.msra.mxu0 0
    %158 = vmatprep.subr.bf16.mxu0 0
    %159 = vmatpush1.bf16.msra.mxu0 0
    %160 = vmatprep.subr.bf16.mxu0 0
    %161 = vmatpush1.bf16.msra.mxu0 0
    %162 = vmatprep.subr.bf16.mxu0 0
    %163 = vmatpush1.bf16.msra.mxu0 0
    %164 = vmatprep.subr.bf16.mxu0 0
    %165 = vmatpush1.bf16.msra.mxu0 0
    %166 = vmatprep.subr.bf16.mxu0 0
    %167 = vmatpush1.bf16.msra.mxu0 0
    %168 = vmatprep.mubr.bf16.mxu0 0
    %169 = vmatmul.mubr.bf16.gmra.mrb[0].mxu0 %v131
    %v170 = vpop.f32.mrb[0].mxu0
    %v171 = vadd.f32 0.0, %v170
    %v172 = vpop.f32.mrb[0].mxu0
    %v173 = vpop.f32.mrb[0].mxu0
    %v174 = vadd.f32 0.0, %v173
    %v175 = vpop.f32.mrb[0].mxu0
    %176 = vmatprep.mubr.bf16.mxu0 0
    %177 = vmatmul.mubr.bf16.gmra.mrb[0].mxu0 %v134
    %v178 = vpop.f32.mrb[0].mxu0
    %v179 = vadd.f32 0.0, %v178
    %v180 = vpop.f32.mrb[0].mxu0
    %v181 = vpop.f32.mrb[0].mxu0
    %v182 = vadd.f32 0.0, %v181
    %v183 = vpop.f32.mrb[0].mxu0
    %184 = vdwg.mxu0
    %v185 = vadd.f32 %v99, %v171
    %v186 = vadd.f32 %v100, %v174
    %v187 = vadd.f32 %v101, %v179
    %v188 = vadd.f32 %v102, %v182
    %vm189 = vcmask 523264
    %190 = vst.msk [vmem:[#allocation2] sm:$0xff] %vm189, %v185
    %191 = vst.msk [vmem:[#allocation2 + $0x8] sm:$0xff] %vm189, %v186
    %192 = vst.msk [vmem:[#allocation2 + $0x10] sm:$0xff] %vm189, %v187
    %193 = vst.msk [vmem:[#allocation2 + $0x18] sm:$0xff] %vm189, %v188
    %v194 = vld [vmem:[#allocation3] sm:$0xff]
    %v195 = vld [vmem:[#allocation3 + $0x8] sm:$0xff]
    %v196 = vld [vmem:[#allocation3 + $0x10] sm:$0xff]
    %v197 = vld [vmem:[#allocation3 + $0x18] sm:$0xff]
    %v198 = vld [vmem:[#allocation10] sm:$0xf]
    %v199 = vld [vmem:[#allocation10 + $0x4] sm:$0xf]
    %v200 = vld [vmem:[#allocation10 + $0x8] sm:$0xf]
    %v201 = vld [vmem:[#allocation10 + $0xc] sm:$0xf]
    %v206 = vunpack.c.l.b16 %v198
    %v207 = vunpack.c.l.b16 %v199
    %v208 = vunpack.c.l.b16 %v200
    %v209 = vunpack.c.l.b16 %v201
    %v210 = vpack.c.b16 %v207, %v206
    %v211 = vpack.c.b16 %v209, %v208
    %214 = vmatprep.subr.bf16.mxu0 0
    %215 = vmatpush1.bf16.msra.mxu0 %v210
    %216 = vmatprep.subr.bf16.mxu0 0
    %217 = vmatpush1.bf16.msra.mxu0 %v211
    %218 = vmatprep.subr.bf16.mxu0 0
    %219 = vmatpush1.bf16.msra.mxu0 0
    %220 = vmatprep.subr.bf16.mxu0 0
    %221 = vmatpush1.bf16.msra.mxu0 0
    %222 = vmatprep.subr.bf16.mxu0 0
    %223 = vmatpush1.bf16.msra.mxu0 0
    %224 = vmatprep.subr.bf16.mxu0 0
    %225 = vmatpush1.bf16.msra.mxu0 0
    %226 = vmatprep.subr.bf16.mxu0 0
    %227 = vmatpush1.bf16.msra.mxu0 0
    %228 = vmatprep.subr.bf16.mxu0 0
    %229 = vmatpush1.bf16.msra.mxu0 0
    %230 = vmatprep.subr.bf16.mxu0 0
    %231 = vmatpush1.bf16.msra.mxu0 0
    %232 = vmatprep.subr.bf16.mxu0 0
    %233 = vmatpush1.bf16.msra.mxu0 0
    %234 = vmatprep.subr.bf16.mxu0 0
    %235 = vmatpush1.bf16.msra.mxu0 0
    %236 = vmatprep.subr.bf16.mxu0 0
    %237 = vmatpush1.bf16.msra.mxu0 0
    %238 = vmatprep.subr.bf16.mxu0 0
    %239 = vmatpush1.bf16.msra.mxu0 0
    %240 = vmatprep.subr.bf16.mxu0 0
    %241 = vmatpush1.bf16.msra.mxu0 0
    %242 = vmatprep.subr.bf16.mxu0 0
    %243 = vmatpush1.bf16.msra.mxu0 0
    %244 = vmatprep.subr.bf16.mxu0 0
    %245 = vmatpush1.bf16.msra.mxu0 0
    %246 = vmatprep.mubr.bf16.mxu0 0
    %247 = vmatmul.mubr.bf16.gmra.mrb[0].mxu0 %v131
    %v248 = vpop.f32.mrb[0].mxu0
    %v249 = vadd.f32 0.0, %v248
    %v250 = vpop.f32.mrb[0].mxu0
    %v251 = vpop.f32.mrb[0].mxu0
    %v252 = vadd.f32 0.0, %v251
    %v253 = vpop.f32.mrb[0].mxu0
    %254 = vmatprep.mubr.bf16.mxu0 0
    %255 = vmatmul.mubr.bf16.gmra.mrb[0].mxu0 %v134
    %v256 = vpop.f32.mrb[0].mxu0
    %v257 = vadd.f32 0.0, %v256
    %v258 = vpop.f32.mrb[0].mxu0
    %v259 = vpop.f32.mrb[0].mxu0
    %v260 = vadd.f32 0.0, %v259
    %v261 = vpop.f32.mrb[0].mxu0
    %262 = vdwg.mxu0
    %v263 = vadd.f32 %v194, %v249
    %v264 = vadd.f32 %v195, %v252
    %v265 = vadd.f32 %v196, %v257
    %v266 = vadd.f32 %v197, %v260
    %267 = vst.msk [vmem:[#allocation3] sm:$0xff] %vm189, %v263
    %268 = vst.msk [vmem:[#allocation3 + $0x8] sm:$0xff] %vm189, %v264
    %269 = vst.msk [vmem:[#allocation3 + $0x10] sm:$0xff] %vm189, %v265
    %270 = vst.msk [vmem:[#allocation3 + $0x18] sm:$0xff] %vm189, %v266
    %v271 = vld [vmem:[#allocation4] sm:$0xff]
    %v272 = vld [vmem:[#allocation4 + $0x8] sm:$0xff]
    %v273 = vld [vmem:[#allocation4 + $0x10] sm:$0xff]
    %v274 = vld [vmem:[#allocation4 + $0x18] sm:$0xff]
    %v275 = vld [vmem:[#allocation11] sm:$0xf]
    %v276 = vld [vmem:[#allocation11 + $0x4] sm:$0xf]
    %v277 = vld [vmem:[#allocation11 + $0x8] sm:$0xf]
    %v278 = vld [vmem:[#allocation11 + $0xc] sm:$0xf]
    %v283 = vunpack.c.l.b16 %v275
    %v284 = vunpack.c.l.b16 %v276
    %v285 = vunpack.c.l.b16 %v277
    %v286 = vunpack.c.l.b16 %v278
    %v287 = vpack.c.b16 %v284, %v283
    %v288 = vpack.c.b16 %v286, %v285
    %291 = vmatprep.subr.bf16.mxu0 0
    %292 = vmatpush1.bf16.msra.mxu0 %v287
    %293 = vmatprep.subr.bf16.mxu0 0
    %294 = vmatpush1.bf16.msra.mxu0 %v288
    %295 = vmatprep.subr.bf16.mxu0 0
    %296 = vmatpush1.bf16.msra.mxu0 0
    %297 = vmatprep.subr.bf16.mxu0 0
    %298 = vmatpush1.bf16.msra.mxu0 0
    %299 = vmatprep.subr.bf16.mxu0 0
    %300 = vmatpush1.bf16.msra.mxu0 0
    %301 = vmatprep.subr.bf16.mxu0 0
    %302 = vmatpush1.bf16.msra.mxu0 0
    %303 = vmatprep.subr.bf16.mxu0 0
    %304 = vmatpush1.bf16.msra.mxu0 0
    %305 = vmatprep.subr.bf16.mxu0 0
    %306 = vmatpush1.bf16.msra.mxu0 0
    %307 = vmatprep.subr.bf16.mxu0 0
    %308 = vmatpush1.bf16.msra.mxu0 0
    %309 = vmatprep.subr.bf16.mxu0 0
    %310 = vmatpush1.bf16.msra.mxu0 0
    %311 = vmatprep.subr.bf16.mxu0 0
    %312 = vmatpush1.bf16.msra.mxu0 0
    %313 = vmatprep.subr.bf16.mxu0 0
    %314 = vmatpush1.bf16.msra.mxu0 0
    %315 = vmatprep.subr.bf16.mxu0 0
    %316 = vmatpush1.bf16.msra.mxu0 0
    %317 = vmatprep.subr.bf16.mxu0 0
    %318 = vmatpush1.bf16.msra.mxu0 0
    %319 = vmatprep.subr.bf16.mxu0 0
    %320 = vmatpush1.bf16.msra.mxu0 0
    %321 = vmatprep.subr.bf16.mxu0 0
    %322 = vmatpush1.bf16.msra.mxu0 0
    %323 = vmatprep.mubr.bf16.mxu0 0
    %324 = vmatmul.mubr.bf16.gmra.mrb[0].mxu0 %v131
    %v325 = vpop.f32.mrb[0].mxu0
    %v326 = vadd.f32 0.0, %v325
    %v327 = vpop.f32.mrb[0].mxu0
    %v328 = vpop.f32.mrb[0].mxu0
    %v329 = vadd.f32 0.0, %v328
    %v330 = vpop.f32.mrb[0].mxu0
    %331 = vmatprep.mubr.bf16.mxu0 0
    %332 = vmatmul.mubr.bf16.gmra.mrb[0].mxu0 %v134
    %v333 = vpop.f32.mrb[0].mxu0
    %v334 = vadd.f32 0.0, %v333
    %v335 = vpop.f32.mrb[0].mxu0
    %v336 = vpop.f32.mrb[0].mxu0
    %v337 = vadd.f32 0.0, %v336
    %v338 = vpop.f32.mrb[0].mxu0
    %339 = vdwg.mxu0
    %v340 = vadd.f32 %v271, %v326
    %v341 = vadd.f32 %v272, %v329
    %v342 = vadd.f32 %v273, %v334
    %v343 = vadd.f32 %v274, %v337
    %344 = vst.msk [vmem:[#allocation4] sm:$0xff] %vm189, %v340
    %345 = vst.msk [vmem:[#allocation4 + $0x8] sm:$0xff] %vm189, %v341
    %346 = vst.msk [vmem:[#allocation4 + $0x10] sm:$0xff] %vm189, %v342
    %347 = vst.msk [vmem:[#allocation4 + $0x18] sm:$0xff] %vm189, %v343
    // Predicated region
    $region38: #{tpu_custom_call.1} parent=1 // pred_check
      %p348 = pneg %p78
    $region39: #{tpu_custom_call.1} parent=1 // pred_check_branch
      %350 = sbr.rel (%p348) target = $region41
    $region40: #{tpu_custom_call.1} parent=1 // pred_region
      %v351 = vld [vmem:[#allocation2] sm:$0xff]
      %v352 = vld [vmem:[#allocation2 + $0x8] sm:$0xff]
      %v353 = vld [vmem:[#allocation2 + $0x10] sm:$0xff]
      %v354 = vld [vmem:[#allocation2 + $0x18] sm:$0xff]
      %v355 = vpack.c.bf16 %v352, %v351
      %v356 = vpack.c.bf16 %v354, %v353
      %v359 = vunpack.c.l.b16 %v355
      %v360 = vunpack.c.h.b16 %v355
      %v361 = vunpack.c.l.b16 %v356
      %v362 = vunpack.c.h.b16 %v356
      %v363 = vpack.c.b16 %v359, %v359
      %v364 = vpack.c.b16 %v360, %v360
      %v365 = vpack.c.b16 %v361, %v361
      %v366 = vpack.c.b16 %v362, %v362
      %vm371 = vcmask 519168
      %372 = vst.msk [vmem:[#allocation13] sm:$0xf] %vm371, %v363
      %373 = vst.msk [vmem:[#allocation13 + $0x4] sm:$0xf] %vm371, %v364
      %374 = vst.msk [vmem:[#allocation13 + $0x8] sm:$0xf] %vm371, %v365
      %375 = vst.msk [vmem:[#allocation13 + $0xc] sm:$0xf] %vm371, %v366
      %v376 = vld [vmem:[#allocation3] sm:$0xff]
      %v377 = vld [vmem:[#allocation3 + $0x8] sm:$0xff]
      %v378 = vld [vmem:[#allocation3 + $0x10] sm:$0xff]
      %v379 = vld [vmem:[#allocation3 + $0x18] sm:$0xff]
      %v380 = vpack.c.bf16 %v377, %v376
      %v381 = vpack.c.bf16 %v379, %v378
      %v384 = vunpack.c.l.b16 %v380
      %v385 = vunpack.c.h.b16 %v380
      %v386 = vunpack.c.l.b16 %v381
      %v387 = vunpack.c.h.b16 %v381
      %v388 = vpack.c.b16 %v384, %v384
      %v389 = vpack.c.b16 %v385, %v385
      %v390 = vpack.c.b16 %v386, %v386
      %v391 = vpack.c.b16 %v387, %v387
      %396 = vst.msk [vmem:[#allocation14] sm:$0xf] %vm371, %v388
      %397 = vst.msk [vmem:[#allocation14 + $0x4] sm:$0xf] %vm371, %v389
      %398 = vst.msk [vmem:[#allocation14 + $0x8] sm:$0xf] %vm371, %v390
      %399 = vst.msk [vmem:[#allocation14 + $0xc] sm:$0xf] %vm371, %v391
      %v400 = vld [vmem:[#allocation4] sm:$0xff]
      %v401 = vld [vmem:[#allocation4 + $0x8] sm:$0xff]
      %v402 = vld [vmem:[#allocation4 + $0x10] sm:$0xff]
      %v403 = vld [vmem:[#allocation4 + $0x18] sm:$0xff]
      %v404 = vpack.c.bf16 %v401, %v400
      %v405 = vpack.c.bf16 %v403, %v402
      %v408 = vunpack.c.l.b16 %v404
      %v409 = vunpack.c.h.b16 %v404
      %v410 = vunpack.c.l.b16 %v405
      %v411 = vunpack.c.h.b16 %v405
      %v412 = vpack.c.b16 %v408, %v408
      %v413 = vpack.c.b16 %v409, %v409
      %v414 = vpack.c.b16 %v410, %v410
      %v415 = vpack.c.b16 %v411, %v411
      %420 = vst.msk [vmem:[#allocation16] sm:$0xf] %vm371, %v412
      %421 = vst.msk [vmem:[#allocation16 + $0x4] sm:$0xf] %vm371, %v413
      %422 = vst.msk [vmem:[#allocation16 + $0x8] sm:$0xf] %vm371, %v414
      %423 = vst.msk [vmem:[#allocation16 + $0xc] sm:$0xf] %vm371, %v415
    $region41: #{tpu_custom_call.1} parent=1 // pred_fallthru
      _
    // Predicated region
    $region42: #{tpu_custom_call.1} parent=1 // pred_check
      _
    $region43: #{tpu_custom_call.1} parent=1 // pred_check_branch
      %425 = sbr.rel (0) target = $region45
    $region44: #{tpu_custom_call.1} parent=1 // pred_region
      %s427 = ssub.s32 256, 256
      %428 = vsyncadd [#allocation7], %s427
      %s429 = sshll.u32 [#allocation13], 4
      %s430 = int_to_ptr.vmem [resolvable:$true] %s429
      %435 = dma.vmem_to_hbm [thread:$0]  %s430, 256, %s4, [#allocation7], 64, 64, 4
    $region45: #{tpu_custom_call.1} parent=1 // pred_fallthru
      _
    // Predicated region
    $region46: #{tpu_custom_call.1} parent=1 // pred_check
      _
    $region47: #{tpu_custom_call.1} parent=1 // pred_check_branch
      %437 = sbr.rel (0) target = $region49
    $region48: #{tpu_custom_call.1} parent=1 // pred_region
      %s439 = ssub.s32 256, 256
      %440 = vsyncadd [#allocation15], %s439
      %s441 = sshll.u32 [#allocation14], 4
      %s442 = int_to_ptr.vmem [resolvable:$true] %s441
      %447 = dma.vmem_to_hbm [thread:$0]  %s442, 256, %s5, [#allocation15], 64, 64, 4
    $region49: #{tpu_custom_call.1} parent=1 // pred_fallthru
      _
    // Predicated region
    $region50: #{tpu_custom_call.1} parent=1 // pred_check
      _
    $region51: #{tpu_custom_call.1} parent=1 // pred_check_branch
      %449 = sbr.rel (0) target = $region53
    $region52: #{tpu_custom_call.1} parent=1 // pred_region
      %s451 = ssub.s32 256, 256
      %452 = vsyncadd [#allocation15], %s451
      %s453 = sshll.u32 [#allocation16], 4
      %s454 = int_to_ptr.vmem [resolvable:$true] %s453
      %459 = dma.vmem_to_hbm [thread:$0]  %s454, 256, %s6, [#allocation15], 64, 64, 4
    $region53: #{tpu_custom_call.1} parent=1 // pred_fallthru
      _
    // Predicated region
    $region54: #{tpu_custom_call.1} parent=1 // pred_check
      _
    $region55: #{tpu_custom_call.1} parent=1 // pred_check_branch
      %461 = sbr.rel (0) target = $region57
    $region56: #{tpu_custom_call.1} parent=1 // pred_region
      %462 = dma.done [#allocation7], 256
    $region57: #{tpu_custom_call.1} parent=1 // pred_fallthru
      _
    // Predicated region
    $region58: #{tpu_custom_call.1} parent=1 // pred_check
      _
    $region59: #{tpu_custom_call.1} parent=1 // pred_check_branch
      %464 = sbr.rel (0) target = $region61
    $region60: #{tpu_custom_call.1} parent=1 // pred_region
      %465 = dma.done [#allocation15], 256
    $region61: #{tpu_custom_call.1} parent=1 // pred_fallthru
      _
    // Predicated region
    $region62: #{tpu_custom_call.1} parent=1 // pred_check
      _
    $region63: #{tpu_custom_call.1} parent=1 // pred_check_branch
      %467 = sbr.rel (0) target = $region65
    $region64: #{tpu_custom_call.1} parent=1 // pred_region
      %468 = dma.done [#allocation15], 256
    $region65: #{tpu_custom_call.1} parent=1 // pred_fallthru
      _
    %469 = vsyncpa [#allocation6], 1
    %470 = vsyncpa [#allocation9], 1
    %471 = vsyncpa [#allocation12], 1
    %472 = vsyncpa [#allocation7], 1
    %473 = vsyncpa [#allocation15], 1

</llo_original>
